<compile_context>
chip_gen: v7x
topology: tpu7x:2x2x1
jax: 0.10.0
libtpu: 0.0.40
codegen_flags: <defaults>
</compile_context>

<pallas_src>
import functools

import jax
import jax.numpy as jnp
import numpy as np
from jax import lax
from jax.experimental import pallas as pl
from jax.experimental.pallas import tpu as pltpu

VTH = 1.0

# TODO(synk): surrogate-gradient backward (SpikeAct / SpikeAct_signed.backward)
# is not implemented; this kernel covers the forward pass only.

_STATIC_UNROLL_T = 32


def _savgpool_kernel(x_ref, p_ref, o_ref, *scratch, vth, ann, ternact,
                     static_unroll, inv_kk):
    """One grid step = (tile_b batch elems) x (one channel block), all T steps.

    x_ref: (tile_b, T, Cb*HpWp)   flattened, lane-padded input block.
    p_ref: (Cb*HpWp, Cb*OhOw)     constant block-diagonal 0/1 pooling matrix.
    o_ref: (tile_b, T, Cb*OhOw)   spikes (or pooled values in ann mode).
    scratch: optional VMEM (T, Cb*OhOw) f32 pool buffer (only for large T).
    """
    tile_b, t_len, _ = x_ref.shape
    n_out = o_ref.shape[-1]
    pmat = p_ref[...]

    def act(pot):
        if ternact:
            # SpikeAct_signed: clamp(sign(x + Vth) + sign(x - Vth), -1, 1)
            return jnp.clip(jnp.sign(pot + vth) + jnp.sign(pot - vth),
                            -1.0, 1.0)
        # SpikeAct: (x >= Vth).float()
        return (pot >= vth).astype(jnp.float32)

    for b in range(tile_b):
        xb = x_ref[b].astype(jnp.float32)                    # (T, Cb*HpWp)
        # Window sums on the MXU; scale afterwards in f32 (count_include_pad).
        pool = jnp.dot(xb, pmat, preferred_element_type=jnp.float32) * inv_kk

        if ann:
            o_ref[b] = pool.astype(o_ref.dtype)
        elif static_unroll:
            # LIF recurrence, fully unrolled; carry = potential - vth*prev.
            carry = jnp.zeros((1, n_out), jnp.float32)
            rows = []
            for t in range(t_len):
                pot = carry + lax.slice_in_dim(pool, t, t + 1, axis=0)
                spike = act(pot)
                rows.append(spike)
                carry = pot - vth * spike
            # Single dense (T, Cb*OhOw) store.
            o_ref[b] = jnp.concatenate(rows, axis=0).astype(o_ref.dtype)
        else:
            # Large-T fallback: park pool in VMEM scratch, loop with unroll.
            pool_sc = scratch[0]
            pool_sc[...] = pool
            ob = o_ref.at[b]

            def step(t, carry):
                pot = carry + pool_sc[pl.ds(t, 1), :]
                spike = act(pot)
                ob[pl.ds(t, 1), :] = spike.astype(o_ref.dtype)
                return pot - vth * spike

            lax.fori_loop(0, t_len, step,
                          jnp.zeros((1, n_out), jnp.float32), unroll=8)


def _pool_matrix(wp, oh, ow, kernel, stride, row_len, tile_c):
    """0/1 matrix mapping a flattened (lane-padded) Hp*Wp image to the oh*ow
    pooling-window sums; block-diagonal over a channel block of size tile_c."""
    m = np.zeros((row_len, oh * ow), np.float32)
    for oi in range(oh):
        for oj in range(ow):
            col = oi * ow + oj
            for ki in range(kernel):
                for kj in range(kernel):
                    m[(oi * stride + ki) * wp + (oj * stride + kj), col] = 1.0
    if tile_c > 1:
        m = np.kron(np.eye(tile_c, dtype=np.float32), m)
    return jnp.asarray(m)


def _padded_bytes(sub, lane, itemsize):
    """(8,128)-tiling-aware footprint of a (sub, lane) VMEM slab."""
    packing = max(1, 4 // itemsize)
    sub_p = -(-sub // (8 * packing)) * (8 * packing)
    lane_p = -(-lane // 128) * 128
    return sub_p * lane_p * itemsize


def savgpool2d(x, *, kernel=2, stride=2, padding=0, vth=VTH,
               ann=False, ternact=False):
    """Pallas implementation of SAvgPool2d.forward.

    x: (B, T, Cin, H, W) float. Returns (B, T, Cin, OH, OW) float32.
    """
    B, T, Cin, H, W = x.shape
    oh = (H + 2 * padding - kernel) // stride + 1
    ow = (W + 2 * padding - kernel) // stride + 1
    ohow = oh * ow

    # ---- One wrapper-side relayout: spatial zero-pad (count_include_pad=True),
    # flatten H*W, lane-pad to a multiple of 128 so all blocks are lane-dense.
    if padding > 0:
        x = jnp.pad(x, ((0, 0), (0, 0), (0, 0),
                        (padding, padding), (padding, padding)))
    hp, wp = H + 2 * padding, W + 2 * padding
    hpwp = hp * wp
    hpwp_p = -(-hpwp // 128) * 128
    x = x.reshape(B, T, Cin, hpwp)
    if hpwp_p != hpwp:
        x = jnp.pad(x, ((0, 0), (0, 0), (0, 0), (0, hpwp_p - hpwp)))
    x2 = x.reshape(B, T, Cin * hpwp_p)

    # ---- Channel block: smallest divisor of Cin whose flattened output block
    # is a multiple of 128 lanes.  Fallback: all channels in one block (block
    # dims == full array dims is always legal).
    tile_c = Cin
    for d in range(1, Cin + 1):
        if Cin % d == 0 and (d * ohow) % 128 == 0:
            tile_c = d
            break
    n_cb = Cin // tile_c

    pmat = _pool_matrix(wp, oh, ow, kernel, stride, hpwp_p, tile_c)

    # ---- (8,128)-tiling-aware VMEM sizing and generation-aware limit.
    in_item = jnp.dtype(x2.dtype).itemsize
    per_b_in = _padded_bytes(T, tile_c * hpwp_p, in_item)
    per_b_out = _padded_bytes(T, tile_c * ohow, 4)
    p_bytes = _padded_bytes(tile_c * hpwp_p, tile_c * ohow, 4)
    headroom = (_padded_bytes(T, tile_c * hpwp_p, 4)
                + 2 * _padded_bytes(T, tile_c * ohow, 4) + p_bytes)

    try:
        vmem_cap = int(pltpu.get_tpu_info().vmem_capacity_bytes)
    except Exception:  # conservative fallback (v7x-sized)
        vmem_cap = 64 << 20
    vmem_limit = int(min(vmem_cap // 2, 48 << 20))   # ~32 MiB on v7x, 48 on v5e/v6e
    base_need = 2 * (per_b_in + per_b_out) + 2 * p_bytes + headroom
    if 2 * base_need > vmem_limit:
        vmem_limit = int(min(vmem_cap * 9 // 10, 2 * base_need))
    block_budget = vmem_limit // 2

    # ---- Batch block: largest divisor of B fitting the budget, capped so the
    # grid keeps >=4 steps (pipeline overlap + megacore) and the in-kernel
    # per-batch unroll stays small.
    min_b_steps = max(1, -(-4 // n_cb))
    cap_b = min(8, max(1, B // min_b_steps))
    tile_b = 1
    for d in range(1, B + 1):
        if B % d or d > cap_b:
            continue
        need = 2 * d * (per_b_in + per_b_out) + 2 * p_bytes + headroom
        if need <= block_budget:
            tile_b = d
    grid = (B // tile_b, n_cb)

    use_scratch = (not ann) and (T > _STATIC_UNROLL_T)
    scratch_shapes = ([pltpu.VMEM((T, tile_c * ohow), jnp.float32)]
                      if use_scratch else [])

    kfn = functools.partial(
        _savgpool_kernel, vth=float(vth), ann=ann, ternact=ternact,
        static_unroll=not use_scratch, inv_kk=1.0 / float(kernel * kernel))

    out_flat = pl.pallas_call(
        kfn,
        out_shape=jax.ShapeDtypeStruct((B, T, Cin * ohow), jnp.float32),
        grid_spec=pltpu.PrefetchScalarGridSpec(
            num_scalar_prefetch=0,
            grid=grid,
            in_specs=[
                pl.BlockSpec((tile_b, T, tile_c * hpwp_p),
                             lambda b, c: (b, 0, c)),
                pl.BlockSpec((tile_c * hpwp_p, tile_c * ohow),
                             lambda b, c: (0, 0)),   # constant -> fetched once
            ],
            out_specs=pl.BlockSpec((tile_b, T, tile_c * ohow),
                                   lambda b, c: (b, 0, c)),
            scratch_shapes=scratch_shapes,
        ),
        compiler_params=pltpu.CompilerParams(
            dimension_semantics=("parallel", "parallel"),
            vmem_limit_bytes=vmem_limit),
    )(x2, pmat)

    return out_flat.reshape(B, T, Cin, oh, ow)


def savgpool2d_ref(x, *, kernel=2, stride=2, padding=0, vth=VTH,
                   ann=False, ternact=False):
    """Pure-JAX reference mirroring the PyTorch module."""
    B, T, Cin, H, W = x.shape
    x2 = x.reshape(B * T, Cin, H, W).astype(jnp.float32)
    summed = lax.reduce_window(
        x2, 0.0, lax.add,
        window_dimensions=(1, 1, kernel, kernel),
        window_strides=(1, 1, stride, stride),
        padding=((0, 0), (0, 0), (padding, padding), (padding, padding)))
    pool = summed / float(kernel * kernel)
    oh, ow = pool.shape[-2:]
    pool = pool.reshape(B, T, Cin, oh, ow)
    if ann:
        return pool

    def step(carry, p_t):
        pot, prev = carry
        pot = pot + p_t - vth * prev
        if ternact:
            spike = jnp.clip(jnp.sign(pot + vth) + jnp.sign(pot - vth), -1.0, 1.0)
        else:
            spike = (pot >= vth).astype(jnp.float32)
        return (pot, spike), spike

    init = (jnp.zeros((B, Cin, oh, ow), jnp.float32),
            jnp.zeros((B, Cin, oh, ow), jnp.float32))
    _, outs = lax.scan(step, init, jnp.transpose(pool, (1, 0, 2, 3, 4)))
    return jnp.transpose(outs, (1, 0, 2, 3, 4))


if __name__ == "__main__":
    key = jax.random.PRNGKey(0)
    B, T, Cin, H, W = 2, 8, 4, 16, 16
    # Quantize inputs to multiples of 1/8 so the pool/recurrence arithmetic is
    # exact and the binary spike comparison is not summation-order sensitive.
    x = jnp.round(jax.random.normal(key, (B, T, Cin, H, W), jnp.float32) * 16.0) / 8.0

    # 1) Standard spiking path: kernel=stride=2, padding=0.
    out = jax.block_until_ready(savgpool2d(x, kernel=2, stride=2, padding=0))
    ref = savgpool2d_ref(x, kernel=2, stride=2, padding=0)
    np.testing.assert_allclose(np.asarray(out), np.asarray(ref), rtol=1e-5, atol=1e-5)

    # 2) Signed (ternary) spikes.
    out = jax.block_until_ready(
        savgpool2d(x, kernel=2, stride=2, padding=0, ternact=True))
    ref = savgpool2d_ref(x, kernel=2, stride=2, padding=0, ternact=True)
    np.testing.assert_allclose(np.asarray(out), np.asarray(ref), rtol=1e-5, atol=1e-5)

    # 3) ANN mode with padding>0 and kernel != stride (continuous outputs).
    out = jax.block_until_ready(
        savgpool2d(x, kernel=3, stride=2, padding=1, ann=True))
    ref = savgpool2d_ref(x, kernel=3, stride=2, padding=1, ann=True)
    np.testing.assert_allclose(np.asarray(out), np.asarray(ref), rtol=1e-5, atol=1e-5)

    print("KERNEL_OK")
</pallas_src>

<mosaic_0001>
module attributes {stable_mosaic.version = 11 : i64} {
  func.func @_savgpool_kernel(%arg0: i32, %arg1: i32, %arg2: memref<1x8x512xf32, #tpu.memory_space<vmem>>, %arg3: memref<512x128xf32, #tpu.memory_space<vmem>>, %arg4: memref<1x8x128xf32, #tpu.memory_space<vmem>>) attributes {dimension_semantics = [#tpu.dimension_semantics<parallel>, #tpu.dimension_semantics<parallel>], iteration_bounds = array<i64: 2, 2>, scalar_prefetch = 0 : i64, scratch_operands = 0 : i64, tpu.core_type = #tpu.core_type<tc>, window_params = [{transform_indices = @transform_0, window_bounds = array<i64: 1, 8, 512>}, {pipeline_mode = #tpu.pipeline_mode<synchronous>, transform_indices = @transform_1, window_bounds = array<i64: 512, 128>}, {transform_indices = @transform_2, window_bounds = array<i64: 1, 8, 128>}]} {
    %c0 = arith.constant 0 : index
    %c0_0 = arith.constant 0 : index
    %0 = vector.load %arg3[%c0, %c0_0] : memref<512x128xf32, #tpu.memory_space<vmem>>, vector<512x128xf32>
    %c0_1 = arith.constant 0 : index
    %c0_2 = arith.constant 0 : index
    %c0_3 = arith.constant 0 : index
    %1 = vector.load %arg2[%c0_1, %c0_2, %c0_3] : memref<1x8x512xf32, #tpu.memory_space<vmem>>, vector<1x8x512xf32>
    %2 = vector.shape_cast %1 : vector<1x8x512xf32> to vector<8x512xf32>
    %cst = arith.constant dense<0.000000e+00> : vector<8x128xf32>
    %3 = tpu.matmul %2, %0, %cst {dimension_numbers = #tpu.dot_dimension_numbers<[1], [0], [0], [1], [0, 0, 1, 1], [], []>} : vector<8x512xf32>, vector<512x128xf32>, vector<8x128xf32> -> vector<8x128xf32>
    %cst_4 = arith.constant 2.500000e-01 : f32
    %4 = vector.broadcast %cst_4 : f32 to vector<8x128xf32>
    %5 = arith.mulf %3, %4 : vector<8x128xf32>
    %cst_5 = arith.constant 0.000000e+00 : f32
    %6 = vector.broadcast %cst_5 : f32 to vector<1x128xf32>
    %7 = vector.extract_strided_slice %5 {offsets = [0, 0], sizes = [1, 128], strides = [1, 1]} : vector<8x128xf32> to vector<1x128xf32>
    %8 = arith.addf %6, %7 : vector<1x128xf32>
    %cst_6 = arith.constant 1.000000e+00 : f32
    %9 = vector.broadcast %cst_6 : f32 to vector<1x128xf32>
    %10 = arith.cmpf oge, %8, %9 : vector<1x128xf32>
    %11 = arith.extui %10 : vector<1x128xi1> to vector<1x128xi32>
    %12 = arith.sitofp %11 : vector<1x128xi32> to vector<1x128xf32>
    %cst_7 = arith.constant 1.000000e+00 : f32
    %13 = vector.broadcast %cst_7 : f32 to vector<1x128xf32>
    %14 = arith.mulf %13, %12 : vector<1x128xf32>
    %15 = arith.subf %8, %14 : vector<1x128xf32>
    %16 = vector.extract_strided_slice %5 {offsets = [1, 0], sizes = [1, 128], strides = [1, 1]} : vector<8x128xf32> to vector<1x128xf32>
    %17 = arith.addf %15, %16 : vector<1x128xf32>
    %cst_8 = arith.constant 1.000000e+00 : f32
    %18 = vector.broadcast %cst_8 : f32 to vector<1x128xf32>
    %19 = arith.cmpf oge, %17, %18 : vector<1x128xf32>
    %20 = arith.extui %19 : vector<1x128xi1> to vector<1x128xi32>
    %21 = arith.sitofp %20 : vector<1x128xi32> to vector<1x128xf32>
    %cst_9 = arith.constant 1.000000e+00 : f32
    %22 = vector.broadcast %cst_9 : f32 to vector<1x128xf32>
    %23 = arith.mulf %22, %21 : vector<1x128xf32>
    %24 = arith.subf %17, %23 : vector<1x128xf32>
    %25 = vector.extract_strided_slice %5 {offsets = [2, 0], sizes = [1, 128], strides = [1, 1]} : vector<8x128xf32> to vector<1x128xf32>
    %26 = arith.addf %24, %25 : vector<1x128xf32>
    %cst_10 = arith.constant 1.000000e+00 : f32
    %27 = vector.broadcast %cst_10 : f32 to vector<1x128xf32>
    %28 = arith.cmpf oge, %26, %27 : vector<1x128xf32>
    %29 = arith.extui %28 : vector<1x128xi1> to vector<1x128xi32>
    %30 = arith.sitofp %29 : vector<1x128xi32> to vector<1x128xf32>
    %cst_11 = arith.constant 1.000000e+00 : f32
    %31 = vector.broadcast %cst_11 : f32 to vector<1x128xf32>
    %32 = arith.mulf %31, %30 : vector<1x128xf32>
    %33 = arith.subf %26, %32 : vector<1x128xf32>
    %34 = vector.extract_strided_slice %5 {offsets = [3, 0], sizes = [1, 128], strides = [1, 1]} : vector<8x128xf32> to vector<1x128xf32>
    %35 = arith.addf %33, %34 : vector<1x128xf32>
    %cst_12 = arith.constant 1.000000e+00 : f32
    %36 = vector.broadcast %cst_12 : f32 to vector<1x128xf32>
    %37 = arith.cmpf oge, %35, %36 : vector<1x128xf32>
    %38 = arith.extui %37 : vector<1x128xi1> to vector<1x128xi32>
    %39 = arith.sitofp %38 : vector<1x128xi32> to vector<1x128xf32>
    %cst_13 = arith.constant 1.000000e+00 : f32
    %40 = vector.broadcast %cst_13 : f32 to vector<1x128xf32>
    %41 = arith.mulf %40, %39 : vector<1x128xf32>
    %42 = arith.subf %35, %41 : vector<1x128xf32>
    %43 = vector.extract_strided_slice %5 {offsets = [4, 0], sizes = [1, 128], strides = [1, 1]} : vector<8x128xf32> to vector<1x128xf32>
    %44 = arith.addf %42, %43 : vector<1x128xf32>
    %cst_14 = arith.constant 1.000000e+00 : f32
    %45 = vector.broadcast %cst_14 : f32 to vector<1x128xf32>
    %46 = arith.cmpf oge, %44, %45 : vector<1x128xf32>
    %47 = arith.extui %46 : vector<1x128xi1> to vector<1x128xi32>
    %48 = arith.sitofp %47 : vector<1x128xi32> to vector<1x128xf32>
    %cst_15 = arith.constant 1.000000e+00 : f32
    %49 = vector.broadcast %cst_15 : f32 to vector<1x128xf32>
    %50 = arith.mulf %49, %48 : vector<1x128xf32>
    %51 = arith.subf %44, %50 : vector<1x128xf32>
    %52 = vector.extract_strided_slice %5 {offsets = [5, 0], sizes = [1, 128], strides = [1, 1]} : vector<8x128xf32> to vector<1x128xf32>
    %53 = arith.addf %51, %52 : vector<1x128xf32>
    %cst_16 = arith.constant 1.000000e+00 : f32
    %54 = vector.broadcast %cst_16 : f32 to vector<1x128xf32>
    %55 = arith.cmpf oge, %53, %54 : vector<1x128xf32>
    %56 = arith.extui %55 : vector<1x128xi1> to vector<1x128xi32>
    %57 = arith.sitofp %56 : vector<1x128xi32> to vector<1x128xf32>
    %cst_17 = arith.constant 1.000000e+00 : f32
    %58 = vector.broadcast %cst_17 : f32 to vector<1x128xf32>
    %59 = arith.mulf %58, %57 : vector<1x128xf32>
    %60 = arith.subf %53, %59 : vector<1x128xf32>
    %61 = vector.extract_strided_slice %5 {offsets = [6, 0], sizes = [1, 128], strides = [1, 1]} : vector<8x128xf32> to vector<1x128xf32>
    %62 = arith.addf %60, %61 : vector<1x128xf32>
    %cst_18 = arith.constant 1.000000e+00 : f32
    %63 = vector.broadcast %cst_18 : f32 to vector<1x128xf32>
    %64 = arith.cmpf oge, %62, %63 : vector<1x128xf32>
    %65 = arith.extui %64 : vector<1x128xi1> to vector<1x128xi32>
    %66 = arith.sitofp %65 : vector<1x128xi32> to vector<1x128xf32>
    %cst_19 = arith.constant 1.000000e+00 : f32
    %67 = vector.broadcast %cst_19 : f32 to vector<1x128xf32>
    %68 = arith.mulf %67, %66 : vector<1x128xf32>
    %69 = arith.subf %62, %68 : vector<1x128xf32>
    %70 = vector.extract_strided_slice %5 {offsets = [7, 0], sizes = [1, 128], strides = [1, 1]} : vector<8x128xf32> to vector<1x128xf32>
    %71 = arith.addf %69, %70 : vector<1x128xf32>
    %cst_20 = arith.constant 1.000000e+00 : f32
    %72 = vector.broadcast %cst_20 : f32 to vector<1x128xf32>
    %73 = arith.cmpf oge, %71, %72 : vector<1x128xf32>
    %74 = arith.extui %73 : vector<1x128xi1> to vector<1x128xi32>
    %75 = arith.sitofp %74 : vector<1x128xi32> to vector<1x128xf32>
    %76 = tpu.concatenate %12, %21, %30, %39, %48, %57, %66, %75 in 0 : vector<1x128xf32>, vector<1x128xf32>, vector<1x128xf32>, vector<1x128xf32>, vector<1x128xf32>, vector<1x128xf32>, vector<1x128xf32>, vector<1x128xf32> -> vector<8x128xf32>
    %c0_21 = arith.constant 0 : index
    %c0_22 = arith.constant 0 : index
    %c0_23 = arith.constant 0 : index
    %77 = vector.load %arg4[%c0_21, %c0_22, %c0_23] : memref<1x8x128xf32, #tpu.memory_space<vmem>>, vector<1x8x128xf32>
    %78 = vector.shape_cast %77 : vector<1x8x128xf32> to vector<8x128xf32>
    %79 = vector.shape_cast %76 : vector<8x128xf32> to vector<1x8x128xf32>
    tpu.vector_store %arg4[%c0_21, %c0_22, %c0_23], %79 {strides = array<i32>} : memref<1x8x128xf32, #tpu.memory_space<vmem>>, vector<1x8x128xf32>,
    return
  }
  func.func @transform_0(%arg0: i32, %arg1: i32) -> (i32, i32, i32) {
    %c0_i32 = arith.constant 0 : i32
    %c0_i32_0 = arith.constant 0 : i32
    return %arg0, %c0_i32, %arg1 : i32, i32, i32
  }
  func.func @transform_1(%arg0: i32, %arg1: i32) -> (i32, i32) {
    %c0_i32 = arith.constant 0 : i32
    %c0_i32_0 = arith.constant 0 : i32
    %c0_i32_1 = arith.constant 0 : i32
    return %c0_i32, %c0_i32_0 : i32, i32
  }
  func.func @transform_2(%arg0: i32, %arg1: i32) -> (i32, i32, i32) {
    %c0_i32 = arith.constant 0 : i32
    %c0_i32_0 = arith.constant 0 : i32
    return %arg0, %c0_i32, %arg1 : i32, i32, i32
  }
}

</mosaic_0001>

<llo_original>
// kernel: tpu_custom_call.1
$region0: #{tpu_custom_call.1}
  #allocation0 [shape = 'u32[]', space=smem, size = 0x4, offset = 0x4, fixed_abs, tag = 'smem constant byte address 0x4 - core index']
  #allocation1 [shape = 'u32[144,128]{1,0:T(1,128)}', space=vmem, size = 0x12000, scoped, tag = 'internal scratch']
  %s0 = inlined_call_operand.hbm [shape: f32[2,8,1024], index: 0, kind: input, shape index: {}]
  %s1 = inlined_call_operand.hbm [shape: f32[512,128], index: 1, kind: input, shape index: {}]
  %s2 = inlined_call_operand.hbm [shape: f32[2,8,256], index: 2, kind: output, shape index: {}]
  %s3 = sld [smem:[#allocation0]]
  $region49: #{tpu_custom_call.1} parent=0
    _
  %s5 = ssub.s32 1, %s3
  %s6 = scalar_select 0, %s5, %s3
  $region1: #{tpu_custom_call.1} parent=0
    #allocation2 [shape = 'u8[32768]{0}', space=vmem, size = 0x8000, scoped, tag = 'input window, operand 0']
    #allocation3 [shape = 's32[2]{0}', space=sflag, size = 0x8, scoped, tag = 'scoped memory for tpu_custom_call.1']
    #allocation4 [shape = 's32[2]{0}', space=sflag, size = 0x8, scoped, tag = 'scoped memory for tpu_custom_call.1']
    #allocation5 [shape = 'u8[262144]{0}', space=vmem, size = 0x40000, scoped, tag = 'input window, operand 1, single buffered']
    #allocation6 [shape = 's32[1]{0}', space=sflag, size = 0x4, scoped, tag = 'scoped memory for tpu_custom_call.1']
    #allocation7 [shape = 'u8[8192]{0}', space=vmem, size = 0x2000, scoped, tag = 'output window, operand 0']
    %7 = vsyncpa [#allocation3], 0
    %s8 = scalar_lea.sflag [#allocation3], 1
    %9 = vsyncpa %s8, 0
    %10 = vsyncpa [#allocation6], 0
    %11 = vsyncpa [#allocation4], 0
    %s12 = scalar_lea.sflag [#allocation4], 1
    %13 = vsyncpa %s12, 0
    loop: start=0, step=1, limit=6
    $region2: #{tpu_custom_call.1} parent=1 // loop_pre_header
      _
    $region3: #{tpu_custom_call.1} parent=1 // loop_header
      %s15 = sphi 0, %s19
      %p16 = scmp.ge.s32.totalorder %s15, 6
      %s22 = sphi 0, %s34
      %s23 = sphi 0, %s30
      %s24 = sphi 0, %s22
      %s25 = sphi 0, %s23
      %s26 = sphi 0, %s24
      %s27 = sphi 0, %s25
      %s39 = sphi 0, %s41
      %s42 = sphi 0, %s39
      %s43 = sphi 0, %s42
      %s59 = sphi 0, %s43
      %s63 = sphi 0, %s63
      %s65 = sphi 0, %s63
      %s66 = sphi 0, %s65
      %s80 = sphi 0, %s66
      %s88 = sphi 0, %s90
      %s91 = sphi 0, %s88
      %s92 = sphi 0, %s91
      %s108 = sphi 0, %s92
    $region4: #{tpu_custom_call.1} parent=1 // loop_header_branch
      %18 = sbr.rel (%p16) target = $region8
    $region5: #{tpu_custom_call.1} parent=1 // loop_body
      %s20 = ssub.s32 %s15, 1
      %s21 = ssub.s32 %s15, 2
      %s28 = sadd.s32 1, %s23
      %p29 = scmp.ge.s32.totalorder %s28, 2
      %s30 = scalar_select %p29, 0, %s28
      %s31 = sadd.s32 1, %s22
      %s32 = scalar_select %p29, %s31, %s22
      %p33 = scmp.ge.s32.totalorder %s32, 2
      %s34 = scalar_select %p33, 0, %s32
      %s35 = ssub.s32 %s22, %s34
      %s36 = ssub.s32 %s23, %s30
      %s37 = sor.u32 %s35, %s36
      %p38 = scmp.eq.s32.totalorder %s37, 0
      %s40 = sadd.s32 %s39, 1
      %s41 = scalar_select %p38, %s39, %s40
      %p44 = pneg %p38
      %p45 = scmp.eq.s32.totalorder %s15, 3
      %p46 = por %p44, %p45
      %p47 = scmp.ne.s32.totalorder %s39, %s42
      %p48 = scmp.eq.s32.totalorder %s15, 0
      %p49 = por %p47, %p48
      %p50 = scmp.ne.s32.totalorder %s39, %s42
      %p51 = scmp.eq.s32.totalorder %s20, 3
      %p52 = por %p50, %p51
      %p53 = scmp.ne.s32.totalorder %s42, %s43
      %p54 = scmp.eq.s32.totalorder %s20, 0
      %p55 = por %p53, %p54
      %p56 = scmp.ne.s32.totalorder %s42, %s43
      %p57 = scmp.eq.s32.totalorder %s21, 3
      %p58 = por %p56, %p57
      %p60 = scmp.ne.s32.totalorder %s43, %s59
      %p61 = scmp.eq.s32.totalorder %s21, 0
      %p62 = por %p60, %p61
      %s64 = sadd.s32 %s63, 1
      %p67 = scmp.eq.s32.totalorder %s15, 3
      %p68 = scmp.ne.s32.totalorder %s63, %s65
      %p69 = scmp.eq.s32.totalorder %s15, 0
      %p70 = por %p68, %p69
      %p71 = scmp.ne.s32.totalorder %s63, %s65
      %p72 = scmp.eq.s32.totalorder %s20, 3
      %p73 = por %p71, %p72
      %p74 = scmp.ne.s32.totalorder %s65, %s66
      %p75 = scmp.eq.s32.totalorder %s20, 0
      %p76 = por %p74, %p75
      %p77 = scmp.ne.s32.totalorder %s65, %s66
      %p78 = scmp.eq.s32.totalorder %s21, 3
      %p79 = por %p77, %p78
      %p81 = scmp.ne.s32.totalorder %s66, %s80
      %p82 = scmp.eq.s32.totalorder %s21, 0
      %p83 = por %p81, %p82
      %s84 = ssub.s32 %s22, %s34
      %s85 = ssub.s32 %s23, %s30
      %s86 = sor.u32 %s84, %s85
      %p87 = scmp.eq.s32.totalorder %s86, 0
      %s89 = sadd.s32 %s88, 1
      %s90 = scalar_select %p87, %s88, %s89
      %p93 = pneg %p87
      %p94 = scmp.eq.s32.totalorder %s15, 3
      %p95 = por %p93, %p94
      %p96 = scmp.ne.s32.totalorder %s88, %s91
      %p97 = scmp.eq.s32.totalorder %s15, 0
      %p98 = por %p96, %p97
      %p99 = scmp.ne.s32.totalorder %s88, %s91
      %p100 = scmp.eq.s32.totalorder %s20, 3
      %p101 = por %p99, %p100
      %p102 = scmp.ne.s32.totalorder %s91, %s92
      %p103 = scmp.eq.s32.totalorder %s20, 0
      %p104 = por %p102, %p103
      %p105 = scmp.ne.s32.totalorder %s91, %s92
      %p106 = scmp.eq.s32.totalorder %s21, 3
      %p107 = por %p105, %p106
      %p109 = scmp.ne.s32.totalorder %s92, %s108
      %p110 = scmp.eq.s32.totalorder %s21, 0
      %p111 = por %p109, %p110
      %p112 = scmp.le.s32.totalorder 1, %s15
      %p113 = scmp.lt.s32.totalorder %s15, 5
      %p114 = pnand %p112, %p113
      %p115 = pneg %p114
      // Predicated region
      $region9: #{tpu_custom_call.1} parent=5 // pred_check
        _
      $region10: #{tpu_custom_call.1} parent=5 // pred_check_branch
        %117 = sbr.rel (%p114) target = $region12
      $region11: #{tpu_custom_call.1} parent=5 // pred_region
        %s118 = ssub.s32 %s15, 1
        // Predicated region
        $region13: #{tpu_custom_call.1} parent=11 // pred_check
          %p119 = pneg %p76
        $region14: #{tpu_custom_call.1} parent=11 // pred_check_branch
          %121 = sbr.rel (%p119) target = $region16
        $region15: #{tpu_custom_call.1} parent=11 // pred_region
          %s123 = ssub.s32 8192, 8192
          %124 = vsyncadd [#allocation6], %s123
          %s125 = sshll.u32 [#allocation5], 4
          %s126 = int_to_ptr.vmem [resolvable:$true] %s125
          %131 = dma.hbm_to_vmem [thread:$0]  %s1, 8192, %s126, [#allocation6], 128, 128, 8
        $region16: #{tpu_custom_call.1} parent=11 // pred_fallthru
          _
      $region12: #{tpu_custom_call.1} parent=5 // pred_fallthru
        _
      %p132 = scmp.lt.s32.totalorder %s15, 4
      // Predicated region
      $region17: #{tpu_custom_call.1} parent=5 // pred_check
        %p133 = pneg %p132
      $region18: #{tpu_custom_call.1} parent=5 // pred_check_branch
        %135 = sbr.rel (%p133) target = $region20
      $region19: #{tpu_custom_call.1} parent=5 // pred_region
        // Predicated region
        $region21: #{tpu_custom_call.1} parent=19 // pred_check
          %p136 = pneg %p49
        $region22: #{tpu_custom_call.1} parent=19 // pred_check_branch
          %138 = sbr.rel (%p136) target = $region24
        $region23: #{tpu_custom_call.1} parent=19 // pred_region
          %s139 = sand.u32 %s39, 1
          %s140 = scalar_lea.sflag [#allocation3], %s139
          %s141 = sand.u32 %s39, 1
          %s142 = smul.addr %s141, 32
          %s143 = scalar_lea.vmem [#allocation2], %s142
          %s144 = smul.u32 4, %s23
          %s146 = ssub.s32 512, 512
          %147 = vsyncadd %s140, %s146
          %s148 = smul.addr %s22, 8
          %s149 = sadd.s32 %s144, %s148
          %s150 = smul.addr %s149, 128
          %s151 = scalar_lea.hbm %s0, %s150
          %s153 = sshll.u32 %s143, 4
          %s154 = int_to_ptr.vmem [resolvable:$true] %s153
          %156 = dma.hbm_to_vmem [thread:$0]  %s151, 512, %s154, %s140
        $region24: #{tpu_custom_call.1} parent=19 // pred_fallthru
          _
      $region20: #{tpu_custom_call.1} parent=5 // pred_fallthru
        _
      %p157 = scmp.le.s32.totalorder 1, %s15
      %p158 = scmp.lt.s32.totalorder %s15, 5
      %p159 = pnand %p157, %p158
      %p160 = pneg %p159
      // Predicated region
      $region25: #{tpu_custom_call.1} parent=5 // pred_check
        _
      $region26: #{tpu_custom_call.1} parent=5 // pred_check_branch
        %162 = sbr.rel (%p159) target = $region28
      $region27: #{tpu_custom_call.1} parent=5 // pred_region
        %s163 = ssub.s32 %s15, 1
        %s164 = sand.u32 %s42, 1
        %s165 = scalar_lea.sflag [#allocation3], %s164
        %s166 = sand.u32 %s42, 1
        %s167 = smul.addr %s166, 32
        %s168 = scalar_lea.vmem [#allocation2], %s167
        // Predicated region
        $region29: #{tpu_custom_call.1} parent=27 // pred_check
          %p169 = pneg %p55
        $region30: #{tpu_custom_call.1} parent=27 // pred_check_branch
          %171 = sbr.rel (%p169) target = $region32
        $region31: #{tpu_custom_call.1} parent=27 // pred_region
          %172 = dma.done %s165, 512
        $region32: #{tpu_custom_call.1} parent=27 // pred_fallthru
          _
        // Predicated region
        $region33: #{tpu_custom_call.1} parent=27 // pred_check
          %p173 = pneg %p76
        $region34: #{tpu_custom_call.1} parent=27 // pred_check_branch
          %175 = sbr.rel (%p173) target = $region36
        $region35: #{tpu_custom_call.1} parent=27 // pred_region
          %176 = dma.done [#allocation6], 8192
        $region36: #{tpu_custom_call.1} parent=27 // pred_fallthru
          _
        %s177 = sand.u32 %s42, 1
        %s178 = scalar_lea.sflag [#allocation3], %s177
        %s179 = sand.u32 %s42, 1
        %s180 = smul.addr %s179, 32
        %s181 = scalar_lea.vmem [#allocation2], %s180
        %p182 = pneg %p55
        %p183 = pneg %p52
        %p184 = pneg %p76
        %p185 = pneg %p73
        %p186 = pneg %p104
        %p187 = pneg %p101
        %s188 = sand.u32 %s91, 1
        %s189 = scalar_lea.sflag [#allocation4], %s188
        %s190 = sand.u32 %s91, 1
        %s191 = smul.addr %s190, 8
        %s192 = scalar_lea.vmem [#allocation7], %s191
        %s193 = smul.u32 4, %s25
        %v194 = vld [vmem:[#allocation5] sm:$0xff]
        %v195 = vld [vmem:[#allocation5 + $0x8] sm:$0xff]
        %v196 = vld [vmem:[#allocation5 + $0x10] sm:$0xff]
        %v197 = vld [vmem:[#allocation5 + $0x18] sm:$0xff]
        %v198 = vld [vmem:[#allocation5 + $0x20] sm:$0xff]
        %v199 = vld [vmem:[#allocation5 + $0x28] sm:$0xff]
        %v200 = vld [vmem:[#allocation5 + $0x30] sm:$0xff]
        %v201 = vld [vmem:[#allocation5 + $0x38] sm:$0xff]
        %v202 = vld [vmem:[#allocation5 + $0x40] sm:$0xff]
        %v203 = vld [vmem:[#allocation5 + $0x48] sm:$0xff]
        %v204 = vld [vmem:[#allocation5 + $0x50] sm:$0xff]
        %v205 = vld [vmem:[#allocation5 + $0x58] sm:$0xff]
        %v206 = vld [vmem:[#allocation5 + $0x60] sm:$0xff]
        %v207 = vld [vmem:[#allocation5 + $0x68] sm:$0xff]
        %v208 = vld [vmem:[#allocation5 + $0x70] sm:$0xff]
        %v209 = vld [vmem:[#allocation5 + $0x78] sm:$0xff]
        %v210 = vld [vmem:[#allocation5 + $0x80] sm:$0xff]
        %v211 = vld [vmem:[#allocation5 + $0x88] sm:$0xff]
        %v212 = vld [vmem:[#allocation5 + $0x90] sm:$0xff]
        %v213 = vld [vmem:[#allocation5 + $0x98] sm:$0xff]
        %v214 = vld [vmem:[#allocation5 + $0xa0] sm:$0xff]
        %v215 = vld [vmem:[#allocation5 + $0xa8] sm:$0xff]
        %v216 = vld [vmem:[#allocation5 + $0xb0] sm:$0xff]
        %v217 = vld [vmem:[#allocation5 + $0xb8] sm:$0xff]
        %v218 = vld [vmem:[#allocation5 + $0xc0] sm:$0xff]
        %v219 = vld [vmem:[#allocation5 + $0xc8] sm:$0xff]
        %v220 = vld [vmem:[#allocation5 + $0xd0] sm:$0xff]
        %v221 = vld [vmem:[#allocation5 + $0xd8] sm:$0xff]
        %v222 = vld [vmem:[#allocation5 + $0xe0] sm:$0xff]
        %v223 = vld [vmem:[#allocation5 + $0xe8] sm:$0xff]
        %v224 = vld [vmem:[#allocation5 + $0xf0] sm:$0xff]
        %v225 = vld [vmem:[#allocation5 + $0xf8] sm:$0xff]
        %v226 = vld [vmem:[#allocation5 + $0x100] sm:$0xff]
        %v227 = vld [vmem:[#allocation5 + $0x108] sm:$0xff]
        %v228 = vld [vmem:[#allocation5 + $0x110] sm:$0xff]
        %v229 = vld [vmem:[#allocation5 + $0x118] sm:$0xff]
        %v230 = vld [vmem:[#allocation5 + $0x120] sm:$0xff]
        %v231 = vld [vmem:[#allocation5 + $0x128] sm:$0xff]
        %v232 = vld [vmem:[#allocation5 + $0x130] sm:$0xff]
        %v233 = vld [vmem:[#allocation5 + $0x138] sm:$0xff]
        %v234 = vld [vmem:[#allocation5 + $0x140] sm:$0xff]
        %v235 = vld [vmem:[#allocation5 + $0x148] sm:$0xff]
        %v236 = vld [vmem:[#allocation5 + $0x150] sm:$0xff]
        %v237 = vld [vmem:[#allocation5 + $0x158] sm:$0xff]
        %v238 = vld [vmem:[#allocation5 + $0x160] sm:$0xff]
        %v239 = vld [vmem:[#allocation5 + $0x168] sm:$0xff]
        %v240 = vld [vmem:[#allocation5 + $0x170] sm:$0xff]
        %v241 = vld [vmem:[#allocation5 + $0x178] sm:$0xff]
        %v242 = vld [vmem:[#allocation5 + $0x180] sm:$0xff]
        %v243 = vld [vmem:[#allocation5 + $0x188] sm:$0xff]
        %v244 = vld [vmem:[#allocation5 + $0x190] sm:$0xff]
        %v245 = vld [vmem:[#allocation5 + $0x198] sm:$0xff]
        %v246 = vld [vmem:[#allocation5 + $0x1a0] sm:$0xff]
        %v247 = vld [vmem:[#allocation5 + $0x1a8] sm:$0xff]
        %v248 = vld [vmem:[#allocation5 + $0x1b0] sm:$0xff]
        %v249 = vld [vmem:[#allocation5 + $0x1b8] sm:$0xff]
        %v250 = vld [vmem:[#allocation5 + $0x1c0] sm:$0xff]
        %v251 = vld [vmem:[#allocation5 + $0x1c8] sm:$0xff]
        %v252 = vld [vmem:[#allocation5 + $0x1d0] sm:$0xff]
        %v253 = vld [vmem:[#allocation5 + $0x1d8] sm:$0xff]
        %v254 = vld [vmem:[#allocation5 + $0x1e0] sm:$0xff]
        %v255 = vld [vmem:[#allocation5 + $0x1e8] sm:$0xff]
        %v256 = vld [vmem:[#allocation5 + $0x1f0] sm:$0xff]
        %v257 = vld [vmem:[#allocation5 + $0x1f8] sm:$0xff]
        %v258 = vld [vmem:[%s168] sm:$0xff]
        %v259 = vld [vmem:[%s168 + $0x8] sm:$0xff]
        %v260 = vld [vmem:[%s168 + $0x10] sm:$0xff]
        %v261 = vld [vmem:[%s168 + $0x18] sm:$0xff]
        %262 = vmatprep.subr.mxu0 0.0
        %263 = vmatpush1.msra.mxu0 %v194
        %264 = vmatprep.subr.mxu0 0.0
        %265 = vmatpush1.msra.mxu0 %v195
        %266 = vmatprep.subr.mxu0 0.0
        %267 = vmatpush1.msra.mxu0 %v196
        %268 = vmatprep.subr.mxu0 0.0
        %269 = vmatpush1.msra.mxu0 %v197
        %270 = vmatprep.subr.mxu0 0.0
        %271 = vmatpush1.msra.mxu0 %v198
        %272 = vmatprep.subr.mxu0 0.0
        %273 = vmatpush1.msra.mxu0 %v199
        %274 = vmatprep.subr.mxu0 0.0
        %275 = vmatpush1.msra.mxu0 %v200
        %276 = vmatprep.subr.mxu0 0.0
        %277 = vmatpush1.msra.mxu0 %v201
        %278 = vmatprep.subr.mxu0 0.0
        %279 = vmatpush1.msra.mxu0 %v202
        %280 = vmatprep.subr.mxu0 0.0
        %281 = vmatpush1.msra.mxu0 %v203
        %282 = vmatprep.subr.mxu0 0.0
        %283 = vmatpush1.msra.mxu0 %v204
        %284 = vmatprep.subr.mxu0 0.0
        %285 = vmatpush1.msra.mxu0 %v205
        %286 = vmatprep.subr.mxu0 0.0
        %287 = vmatpush1.msra.mxu0 %v206
        %288 = vmatprep.subr.mxu0 0.0
        %289 = vmatpush1.msra.mxu0 %v207
        %290 = vmatprep.subr.mxu0 0.0
        %291 = vmatpush1.msra.mxu0 %v208
        %292 = vmatprep.subr.mxu0 0.0
        %293 = vmatpush1.msra.mxu0 %v209
        %294 = vmatprep.subr.mxu0 0.0
        %295 = vmatpush1.msra.mxu0 %v210
        %296 = vmatprep.subr.mxu0 0.0
        %297 = vmatpush1.msra.mxu0 %v211
        %298 = vmatprep.subr.mxu0 0.0
        %299 = vmatpush1.msra.mxu0 %v212
        %300 = vmatprep.subr.mxu0 0.0
        %301 = vmatpush1.msra.mxu0 %v213
        %302 = vmatprep.subr.mxu0 0.0
        %303 = vmatpush1.msra.mxu0 %v214
        %304 = vmatprep.subr.mxu0 0.0
        %305 = vmatpush1.msra.mxu0 %v215
        %306 = vmatprep.subr.mxu0 0.0
        %307 = vmatpush1.msra.mxu0 %v216
        %308 = vmatprep.subr.mxu0 0.0
        %309 = vmatpush1.msra.mxu0 %v217
        %310 = vmatprep.subr.mxu0 0.0
        %311 = vmatpush1.msra.mxu0 %v218
        %312 = vmatprep.subr.mxu0 0.0
        %313 = vmatpush1.msra.mxu0 %v219
        %314 = vmatprep.subr.mxu0 0.0
        %315 = vmatpush1.msra.mxu0 %v220
        %316 = vmatprep.subr.mxu0 0.0
        %317 = vmatpush1.msra.mxu0 %v221
        %318 = vmatprep.subr.mxu0 0.0
        %319 = vmatpush1.msra.mxu0 %v222
        %320 = vmatprep.subr.mxu0 0.0
        %321 = vmatpush1.msra.mxu0 %v223
        %322 = vmatprep.subr.mxu0 0.0
        %323 = vmatpush1.msra.mxu0 %v224
        %324 = vmatprep.subr.mxu0 0.0
        %325 = vmatpush1.msra.mxu0 %v225
        %326 = vmatprep.mubr.f32.mxu0 %v259
        %327 = vmatmul.mubr.f32.gmra.mrb[0].mxu0 %v258
        %v328 = vpop.f32.mrb[0].mxu0
        %v329 = vadd.f32 0.0, %v328
        %v330 = vpop.f32.mrb[0].mxu0
        %331 = vdwg.mxu0
        %332 = vmatprep.subr.mxu0 0.0
        %333 = vmatpush1.msra.mxu0 %v226
        %334 = vmatprep.subr.mxu0 0.0
        %335 = vmatpush1.msra.mxu0 %v227
        %336 = vmatprep.subr.mxu0 0.0
        %337 = vmatpush1.msra.mxu0 %v228
        %338 = vmatprep.subr.mxu0 0.0
        %339 = vmatpush1.msra.mxu0 %v229
        %340 = vmatprep.subr.mxu0 0.0
        %341 = vmatpush1.msra.mxu0 %v230
        %342 = vmatprep.subr.mxu0 0.0
        %343 = vmatpush1.msra.mxu0 %v231
        %344 = vmatprep.subr.mxu0 0.0
        %345 = vmatpush1.msra.mxu0 %v232
        %346 = vmatprep.subr.mxu0 0.0
        %347 = vmatpush1.msra.mxu0 %v233
        %348 = vmatprep.subr.mxu0 0.0
        %349 = vmatpush1.msra.mxu0 %v234
        %350 = vmatprep.subr.mxu0 0.0
        %351 = vmatpush1.msra.mxu0 %v235
        %352 = vmatprep.subr.mxu0 0.0
        %353 = vmatpush1.msra.mxu0 %v236
        %354 = vmatprep.subr.mxu0 0.0
        %355 = vmatpush1.msra.mxu0 %v237
        %356 = vmatprep.subr.mxu0 0.0
        %357 = vmatpush1.msra.mxu0 %v238
        %358 = vmatprep.subr.mxu0 0.0
        %359 = vmatpush1.msra.mxu0 %v239
        %360 = vmatprep.subr.mxu0 0.0
        %361 = vmatpush1.msra.mxu0 %v240
        %362 = vmatprep.subr.mxu0 0.0
        %363 = vmatpush1.msra.mxu0 %v241
        %364 = vmatprep.subr.mxu0 0.0
        %365 = vmatpush1.msra.mxu0 %v242
        %366 = vmatprep.subr.mxu0 0.0
        %367 = vmatpush1.msra.mxu0 %v243
        %368 = vmatprep.subr.mxu0 0.0
        %369 = vmatpush1.msra.mxu0 %v244
        %370 = vmatprep.subr.mxu0 0.0
        %371 = vmatpush1.msra.mxu0 %v245
        %372 = vmatprep.subr.mxu0 0.0
        %373 = vmatpush1.msra.mxu0 %v246
        %374 = vmatprep.subr.mxu0 0.0
        %375 = vmatpush1.msra.mxu0 %v247
        %376 = vmatprep.subr.mxu0 0.0
        %377 = vmatpush1.msra.mxu0 %v248
        %378 = vmatprep.subr.mxu0 0.0
        %379 = vmatpush1.msra.mxu0 %v249
        %380 = vmatprep.subr.mxu0 0.0
        %381 = vmatpush1.msra.mxu0 %v250
        %382 = vmatprep.subr.mxu0 0.0
        %383 = vmatpush1.msra.mxu0 %v251
        %384 = vmatprep.subr.mxu0 0.0
        %385 = vmatpush1.msra.mxu0 %v252
        %386 = vmatprep.subr.mxu0 0.0
        %387 = vmatpush1.msra.mxu0 %v253
        %388 = vmatprep.subr.mxu0 0.0
        %389 = vmatpush1.msra.mxu0 %v254
        %390 = vmatprep.subr.mxu0 0.0
        %391 = vmatpush1.msra.mxu0 %v255
        %392 = vmatprep.subr.mxu0 0.0
        %393 = vmatpush1.msra.mxu0 %v256
        %394 = vmatprep.subr.mxu0 0.0
        %395 = vmatpush1.msra.mxu0 %v257
        %396 = vmatprep.mubr.f32.mxu0 %v261
        %397 = vmatmul.mubr.f32.gmra.mrb[0].mxu0 %v260
        %v398 = vpop.f32.mrb[0].mxu0
        %v399 = vadd.f32 %v329, %v398
        %v400 = vpop.f32.mrb[0].mxu0
        %401 = vdwg.mxu0
        %v402 = vmul.f32 %v399, 0.25
        %v403 = vadd.f32 %v402, 0.0
        %vm404 = vcmp.ge.f32.partialorder %v403, 1.0
        %v405 = vsel %vm404, 1, 0
        %v406 = vcvt.s32.f32 %v405
        %v407 = vsub.f32 %v403, %v406
        %v409 = vrot.slane %v402, 1
        %v411 = vadd.f32 %v407, %v409
        %vm412 = vcmp.ge.f32.partialorder %v411, 1.0
        %v413 = vsel %vm412, 1, 0
        %v414 = vcvt.s32.f32 %v413
        %v415 = vsub.f32 %v411, %v414
        %v416 = vrot.slane %v402, 2
        %v418 = vadd.f32 %v415, %v416
        %vm419 = vcmp.ge.f32.partialorder %v418, 1.0
        %v420 = vsel %vm419, 1, 0
        %v421 = vcvt.s32.f32 %v420
        %v422 = vsub.f32 %v418, %v421
        %v423 = vrot.slane %v402, 3
        %v425 = vadd.f32 %v422, %v423
        %vm426 = vcmp.ge.f32.partialorder %v425, 1.0
        %v427 = vsel %vm426, 1, 0
        %v428 = vcvt.s32.f32 %v427
        %v429 = vsub.f32 %v425, %v428
        %v430 = vrot.slane %v402, 4
        %v432 = vadd.f32 %v429, %v430
        %vm433 = vcmp.ge.f32.partialorder %v432, 1.0
        %v434 = vsel %vm433, 1, 0
        %v435 = vcvt.s32.f32 %v434
        %v436 = vsub.f32 %v432, %v435
        %v437 = vrot.slane %v402, 5
        %v439 = vadd.f32 %v436, %v437
        %vm440 = vcmp.ge.f32.partialorder %v439, 1.0
        %v441 = vsel %vm440, 1, 0
        %v442 = vcvt.s32.f32 %v441
        %v443 = vsub.f32 %v439, %v442
        %v444 = vrot.slane %v402, 6
        %v446 = vadd.f32 %v443, %v444
        %vm447 = vcmp.ge.f32.partialorder %v446, 1.0
        %v448 = vsel %vm447, 1, 0
        %v449 = vcvt.s32.f32 %v448
        %v450 = vsub.f32 %v446, %v449
        %v451 = vrot.slane %v402, 7
        %v453 = vadd.f32 %v450, %v451
        %vm454 = vcmp.ge.f32.partialorder %v453, 1.0
        %v455 = vsel %vm454, 1, 0
        %v456 = vcvt.s32.f32 %v455
        %v458 = vrot.slane %v414, 7
        %v461 = vrot.slane %v421, 6
        %v464 = vrot.slane %v428, 5
        %v467 = vrot.slane %v435, 4
        %v470 = vrot.slane %v442, 3
        %v473 = vrot.slane %v449, 2
        %v476 = vrot.slane %v456, 1
        %vm478 = vcmask 1040384
        %v479 = vsel %vm478, %v406, %v458
        %vm480 = vcmask 1041408
        %v481 = vsel %vm480, %v479, %v461
        %vm482 = vcmask 1042432
        %v483 = vsel %vm482, %v481, %v464
        %vm484 = vcmask 1043456
        %v485 = vsel %vm484, %v483, %v467
        %vm486 = vcmask 1044480
        %v487 = vsel %vm486, %v485, %v470
        %vm488 = vcmask 1045504
        %v489 = vsel %vm488, %v487, %v473
        %vm490 = vcmask 1046528
        %v491 = vsel %vm490, %v489, %v476
        %492 = vst [vmem:[%s192] sm:$0xff] %v491
        %s493 = sand.u32 %s91, 1
        %s494 = scalar_lea.sflag [#allocation4], %s493
        %s495 = sand.u32 %s91, 1
        %s496 = smul.addr %s495, 8
        %s497 = scalar_lea.vmem [#allocation7], %s496
        // Predicated region
        $region37: #{tpu_custom_call.1} parent=27 // pred_check
          %p498 = pneg %p101
        $region38: #{tpu_custom_call.1} parent=27 // pred_check_branch
          %500 = sbr.rel (%p498) target = $region40
        $region39: #{tpu_custom_call.1} parent=27 // pred_region
          %s502 = ssub.s32 128, 128
          %503 = vsyncadd %s494, %s502
          %s504 = smul.addr %s24, 2
          %s505 = sadd.s32 %s25, %s504
          %s506 = smul.addr %s505, 128
          %s507 = scalar_lea.hbm %s2, %s506
          %s509 = sshll.u32 %s497, 4
          %s510 = int_to_ptr.vmem [resolvable:$true] %s509
          %512 = dma.vmem_to_hbm [thread:$0]  %s510, 128, %s507, %s494
        $region40: #{tpu_custom_call.1} parent=27 // pred_fallthru
          _
      $region28: #{tpu_custom_call.1} parent=5 // pred_fallthru
        _
      %p513 = scmp.le.s32.totalorder 2, %s15
      // Predicated region
      $region41: #{tpu_custom_call.1} parent=5 // pred_check
        %p514 = pneg %p513
      $region42: #{tpu_custom_call.1} parent=5 // pred_check_branch
        %516 = sbr.rel (%p514) target = $region44
      $region43: #{tpu_custom_call.1} parent=5 // pred_region
        %s517 = ssub.s32 %s15, 2
        // Predicated region
        $region45: #{tpu_custom_call.1} parent=43 // pred_check
          %p518 = pneg %p107
        $region46: #{tpu_custom_call.1} parent=43 // pred_check_branch
          %520 = sbr.rel (%p518) target = $region48
        $region47: #{tpu_custom_call.1} parent=43 // pred_region
          %s521 = sand.u32 %s92, 1
          %s522 = scalar_lea.sflag [#allocation4], %s521
          %s523 = sand.u32 %s92, 1
          %s524 = smul.addr %s523, 8
          %s525 = scalar_lea.vmem [#allocation7], %s524
          %526 = dma.done %s522, 128
        $region48: #{tpu_custom_call.1} parent=43 // pred_fallthru
          _
      $region44: #{tpu_custom_call.1} parent=5 // pred_fallthru
        _
    $region6: #{tpu_custom_call.1} parent=1 // loop_footer
      %s19 = sadd.s32 1, %s15
    $region7: #{tpu_custom_call.1} parent=1 // loop_footer_branch
      %14 = sbr.rel target = $region3
    $region8: #{tpu_custom_call.1} parent=1 // loop_exit
      _
    %527 = vsyncpa [#allocation3], 1
    %s528 = scalar_lea.sflag [#allocation3], 1
    %529 = vsyncpa %s528, 1
    %530 = vsyncpa [#allocation6], 1
    %531 = vsyncpa [#allocation4], 1
    %s532 = scalar_lea.sflag [#allocation4], 1
    %533 = vsyncpa %s532, 1

</llo_original>
